<compile_context>
chip_gen: v7x
topology: tpu7x:2x2x1
jax: 0.10.0
libtpu: 0.0.40
codegen_flags: <defaults>
</compile_context>

<pallas_src>
import jax
import jax.numpy as jnp
from jax.experimental import pallas as pl
from jax.experimental.pallas import tpu as pltpu

IN_FEATURES = 512
HIDDEN = 50
OUT = 1


def mlp_disc_kernel(x_ref, w1_ref, b1_ref, w2_ref, b2_ref, o_ref):
    # x tile: [TILE_B, 512].  Weights/biases are VMEM-resident across the grid.
    x = x_ref[...]
    # fc1 on the MXU: [TILE_B, 512] @ [512, 50] -> [TILE_B, 50], f32 accumulation.
    h = jnp.dot(x, w1_ref[...], preferred_element_type=jnp.float32)
    h = jnp.maximum(h + b1_ref[...], 0.0)                        # bias + ReLU (VPU)
    # fc2 (out_features == 1): VPU multiply against the broadcast w2 row + XLU
    # lane-reduce; the MXU is idle after fc1 and everything hides under the DMA.
    y_col = jnp.sum(h * w2_ref[...], axis=-1, keepdims=True)     # [TILE_B, 1]
    # Transpose to a lane-dense row FIRST, so the bias add + sigmoid touch
    # ~TILE_B/128 dense vregs instead of TILE_B/8 lane-sparse ones.
    y_row = jnp.transpose(y_col, (1, 0))                          # [1, TILE_B]
    y_row = jax.nn.sigmoid(y_row + b2_ref[...])                   # EUP, lane-dense
    # Lane-dense store: one (1, 1, TILE_B) block per tile (batch on the lane axis).
    o_ref[...] = y_row[None].astype(o_ref.dtype)


def mlp_discriminator(x, w1, b1, w2, b2, *, tile_b=2048):
    """x: [B, 512] f32 -> [B, 1] f32.

    Batch-tiled: grid iterates over TILE_B-row slabs of x (last slab is a Pallas
    boundary block -- no jnp.pad copy of x); weights stay VMEM-resident.
    w1: [512, 50], b1: [1, 50], w2: [50, 1], b2: [1, 1] (PyTorch fc semantics,
    stored transposed so the kernel computes x @ W + b directly).
    """
    B = x.shape[0]
    # Tile: at most `tile_b`, no larger than B rounded up to a sublane multiple (8).
    tb = max(8, min(tile_b, ((B + 7) // 8) * 8))
    # If that would give a single-tile grid, halve the tile so g >= 2 and the
    # "parallel" batch axis can span both TensorCores on v7x (no-op for tiny B).
    if B >= 16 and pl.cdiv(B, tb) == 1:
        tb = max(8, ((pl.cdiv(B, 2) + 7) // 8) * 8)
    g = pl.cdiv(B, tb)  # last block may read past B: garbage tail, sliced below

    w2_row = jnp.reshape(w2, (1, HIDDEN))  # (50, 1) -> (1, 50) for the VPU path

    cost = pl.CostEstimate(
        flops=2 * B * IN_FEATURES * HIDDEN + 2 * B * HIDDEN,
        transcendentals=B,
        bytes_accessed=(B * IN_FEATURES + w1.size + b1.size + w2.size + b2.size + B) * 4,
    )

    out = pl.pallas_call(
        mlp_disc_kernel,
        out_shape=jax.ShapeDtypeStruct((g, 1, tb), jnp.float32),
        grid=(g,),
        in_specs=[
            # x: tiled along the batch axis -> pipelined prefetch/compute/writeback.
            # TODO(synk): optionally cast x to bf16 in HBM for ~2x throughput
            # (numerics-changing; MXU already accumulates in f32).
            pl.BlockSpec((tb, IN_FEATURES), lambda i: (i, 0)),
            # weights/biases: same block every step -> DMA'd once, VMEM-resident.
            pl.BlockSpec((IN_FEATURES, HIDDEN), lambda i: (0, 0)),
            pl.BlockSpec((1, HIDDEN), lambda i: (0, 0)),
            pl.BlockSpec((1, HIDDEN), lambda i: (0, 0)),
            pl.BlockSpec((1, OUT), lambda i: (0, 0)),
        ],
        # Lane-dense output slab: one (1, TILE_B) row per tile.
        out_specs=pl.BlockSpec((1, 1, tb), lambda i: (i, 0, 0)),
        compiler_params=pltpu.CompilerParams(
            dimension_semantics=("parallel",)),
        cost_estimate=cost,
    )(x, w1, b1, w2_row, b2)

    # Undo the lane-dense layout; lanes >= B of the last block hold boundary-block
    # garbage and are intentionally dropped here.
    return out.reshape(-1)[:B].reshape(B, OUT)


def init_params(key):
    """Deterministic init mimicking nn.Linear default (uniform +/- 1/sqrt(fan_in))."""
    k1, k2, k3, k4 = jax.random.split(key, 4)
    bound1 = 1.0 / jnp.sqrt(IN_FEATURES)
    bound2 = 1.0 / jnp.sqrt(HIDDEN)
    # Stored as [in, out] (transpose of PyTorch's [out, in]) so the kernel does x @ W.
    w1 = jax.random.uniform(k1, (IN_FEATURES, HIDDEN), jnp.float32, -bound1, bound1)
    b1 = jax.random.uniform(k2, (1, HIDDEN), jnp.float32, -bound1, bound1)
    w2 = jax.random.uniform(k3, (HIDDEN, OUT), jnp.float32, -bound2, bound2)
    b2 = jax.random.uniform(k4, (1, OUT), jnp.float32, -bound2, bound2)
    return w1, b1, w2, b2


def reference(x, w1, b1, w2, b2):
    h = jnp.maximum(x @ w1 + b1, 0.0)
    return jax.nn.sigmoid(h @ w2 + b2)


if __name__ == "__main__":
    key = jax.random.PRNGKey(0)
    kx, kp = jax.random.split(key)
    w1, b1, w2, b2 = init_params(kp)

    # Small smoke test at batch=2 (single partial boundary tile).
    B = 2
    x = jax.random.normal(kx, (B, IN_FEATURES), jnp.float32)
    out = jax.block_until_ready(mlp_discriminator(x, w1, b1, w2, b2))
    ref = reference(x, w1, b1, w2, b2)
    assert out.shape == (B, OUT), out.shape
    assert jnp.allclose(out, ref, atol=1e-5, rtol=1e-5), (out, ref)

    # Multi-tile path: batch grid with a partial final block and NO pad copy of x.
    B2 = 300
    x2 = jax.random.normal(kx, (B2, IN_FEATURES), jnp.float32)
    out2 = jax.block_until_ready(mlp_discriminator(x2, w1, b1, w2, b2, tile_b=128))
    ref2 = reference(x2, w1, b1, w2, b2)
    assert out2.shape == (B2, OUT), out2.shape
    assert jnp.allclose(out2, ref2, atol=1e-5, rtol=1e-5)

    print("KERNEL_OK")
</pallas_src>

<mosaic_0001>
module attributes {stable_mosaic.version = 11 : i64} {
  func.func @mlp_disc_kernel(%arg0: i32, %arg1: memref<8x512xf32, #tpu.memory_space<vmem>>, %arg2: memref<512x50xf32, #tpu.memory_space<vmem>>, %arg3: memref<1x50xf32, #tpu.memory_space<vmem>>, %arg4: memref<1x50xf32, #tpu.memory_space<vmem>>, %arg5: memref<1x1xf32, #tpu.memory_space<vmem>>, %arg6: memref<1x1x8xf32, #tpu.memory_space<vmem>>) attributes {dimension_semantics = [#tpu.dimension_semantics<parallel>], iteration_bounds = array<i64: 1>, scalar_prefetch = 0 : i64, scratch_operands = 0 : i64, tpu.core_type = #tpu.core_type<tc>, window_params = [{transform_indices = @transform_0, window_bounds = array<i64: 8, 512>}, {pipeline_mode = #tpu.pipeline_mode<synchronous>, transform_indices = @transform_1, window_bounds = array<i64: 512, 50>}, {pipeline_mode = #tpu.pipeline_mode<synchronous>, transform_indices = @transform_2, window_bounds = array<i64: 1, 50>}, {pipeline_mode = #tpu.pipeline_mode<synchronous>, transform_indices = @transform_3, window_bounds = array<i64: 1, 50>}, {pipeline_mode = #tpu.pipeline_mode<synchronous>, transform_indices = @transform_4, window_bounds = array<i64: 1, 1>}, {transform_indices = @transform_5, window_bounds = array<i64: 1, 1, 8>}]} {
    %c0 = arith.constant 0 : index
    %c0_0 = arith.constant 0 : index
    %0 = vector.load %arg1[%c0, %c0_0] : memref<8x512xf32, #tpu.memory_space<vmem>>, vector<8x512xf32>
    %c0_1 = arith.constant 0 : index
    %c0_2 = arith.constant 0 : index
    %1 = vector.load %arg2[%c0_1, %c0_2] : memref<512x50xf32, #tpu.memory_space<vmem>>, vector<512x50xf32>
    %cst = arith.constant dense<0.000000e+00> : vector<8x50xf32>
    %2 = tpu.matmul %0, %1, %cst {dimension_numbers = #tpu.dot_dimension_numbers<[1], [0], [0], [1], [0, 0, 1, 1], [], []>} : vector<8x512xf32>, vector<512x50xf32>, vector<8x50xf32> -> vector<8x50xf32>
    %c0_3 = arith.constant 0 : index
    %c0_4 = arith.constant 0 : index
    %3 = vector.load %arg3[%c0_3, %c0_4] : memref<1x50xf32, #tpu.memory_space<vmem>>, vector<1x50xf32>
    %4 = vector.broadcast %3 : vector<1x50xf32> to vector<8x50xf32>
    %5 = arith.addf %2, %4 : vector<8x50xf32>
    %cst_5 = arith.constant 0.000000e+00 : f32
    %6 = vector.broadcast %cst_5 : f32 to vector<8x50xf32>
    %7 = arith.maximumf %5, %6 : vector<8x50xf32>
    %c0_6 = arith.constant 0 : index
    %c0_7 = arith.constant 0 : index
    %8 = vector.load %arg4[%c0_6, %c0_7] : memref<1x50xf32, #tpu.memory_space<vmem>>, vector<1x50xf32>
    %9 = vector.broadcast %8 : vector<1x50xf32> to vector<8x50xf32>
    %10 = arith.mulf %7, %9 : vector<8x50xf32>
    %cst_8 = arith.constant dense<0.000000e+00> : vector<8xf32>
    %11 = vector.multi_reduction <add>, %10, %cst_8 [1] : vector<8x50xf32> to vector<8xf32>
    %12 = vector.shape_cast %11 : vector<8xf32> to vector<8x1xf32>
    %13 = tpu.transpose %12, [1, 0] : vector<8x1xf32> -> vector<1x8xf32>
    %c0_9 = arith.constant 0 : index
    %c0_10 = arith.constant 0 : index
    %14 = vector.load %arg5[%c0_9, %c0_10] : memref<1x1xf32, #tpu.memory_space<vmem>>, vector<1x1xf32>
    %15 = vector.broadcast %14 : vector<1x1xf32> to vector<1x8xf32>
    %16 = arith.addf %13, %15 : vector<1x8xf32>
    %17 = arith.negf %16 : vector<1x8xf32>
    %18 = math.exp %17 : vector<1x8xf32>
    %cst_11 = arith.constant 1.000000e+00 : f32
    %19 = vector.broadcast %cst_11 : f32 to vector<1x8xf32>
    %20 = arith.addf %19, %18 : vector<1x8xf32>
    %21 = arith.divf %19, %20 : vector<1x8xf32>
    %22 = vector.shape_cast %21 : vector<1x8xf32> to vector<1x1x8xf32>
    %c0_12 = arith.constant 0 : index
    %c0_13 = arith.constant 0 : index
    %c0_14 = arith.constant 0 : index
    %23 = vector.load %arg6[%c0_12, %c0_13, %c0_14] : memref<1x1x8xf32, #tpu.memory_space<vmem>>, vector<1x1x8xf32>
    tpu.vector_store %arg6[%c0_12, %c0_13, %c0_14], %22 {strides = array<i32>} : memref<1x1x8xf32, #tpu.memory_space<vmem>>, vector<1x1x8xf32>,
    return
  }
  func.func @transform_0(%arg0: i32) -> (i32, i32) {
    %c0_i32 = arith.constant 0 : i32
    %c0_i32_0 = arith.constant 0 : i32
    return %arg0, %c0_i32 : i32, i32
  }
  func.func @transform_1(%arg0: i32) -> (i32, i32) {
    %c0_i32 = arith.constant 0 : i32
    %c0_i32_0 = arith.constant 0 : i32
    %c0_i32_1 = arith.constant 0 : i32
    return %c0_i32, %c0_i32_0 : i32, i32
  }
  func.func @transform_2(%arg0: i32) -> (i32, i32) {
    %c0_i32 = arith.constant 0 : i32
    %c0_i32_0 = arith.constant 0 : i32
    %c0_i32_1 = arith.constant 0 : i32
    return %c0_i32, %c0_i32_0 : i32, i32
  }
  func.func @transform_3(%arg0: i32) -> (i32, i32) {
    %c0_i32 = arith.constant 0 : i32
    %c0_i32_0 = arith.constant 0 : i32
    %c0_i32_1 = arith.constant 0 : i32
    return %c0_i32, %c0_i32_0 : i32, i32
  }
  func.func @transform_4(%arg0: i32) -> (i32, i32) {
    %c0_i32 = arith.constant 0 : i32
    %c0_i32_0 = arith.constant 0 : i32
    %c0_i32_1 = arith.constant 0 : i32
    return %c0_i32, %c0_i32_0 : i32, i32
  }
  func.func @transform_5(%arg0: i32) -> (i32, i32, i32) {
    %c0_i32 = arith.constant 0 : i32
    %c0_i32_0 = arith.constant 0 : i32
    %c0_i32_1 = arith.constant 0 : i32
    return %arg0, %c0_i32, %c0_i32_0 : i32, i32, i32
  }
}

</mosaic_0001>

<llo_original>
// kernel: tpu_custom_call.1
$region0: #{tpu_custom_call.1}
  #allocation0 [shape = 'u32[]', space=smem, size = 0x4, offset = 0x4, fixed_abs, tag = 'smem constant byte address 0x4 - core index']
  #allocation1 [shape = 'u32[144,128]{1,0:T(1,128)}', space=vmem, size = 0x12000, scoped, tag = 'internal scratch']
  #allocation2 [shape = 'f32[1,1]{1,0:T(1,128)S(1)}', space=vmem, size = 0x200, scoped, tag = 'scoped memory for tpu_custom_call.1']
  %s0 = inlined_call_operand.vmem [shape: f32[2,512], index: 0, kind: input, shape index: {}]
  %s1 = inlined_call_operand.vmem [shape: f32[512,50], index: 1, kind: input, shape index: {}]
  %s2 = inlined_call_operand.vmem [shape: f32[1,50], index: 2, kind: input, shape index: {}]
  %s3 = inlined_call_operand.vmem [shape: f32[1,50], index: 3, kind: input, shape index: {}]
  %s4 = inlined_call_operand.<no memory space> [shape: f32[1,1], index: 4, kind: input, shape index: {}]
  %s5 = inlined_call_operand.hbm [shape: f32[1,1,8], index: 5, kind: output, shape index: {}]
  %s6 = sld [smem:[#allocation0]]
  $region30: #{tpu_custom_call.1} parent=0
    _
  %s8 = ssub.s32 1, %s6
  %s9 = scalar_select 0, %s8, %s6
  %v10 = vstv %s4
  %11 = vst [vmem:[#allocation2] sm:$0x1] %v10
  $region1: #{tpu_custom_call.1} parent=0
    #allocation3 [shape = 'u8[512]{0}', space=vmem, size = 0x400, scoped, tag = 'output window, operand 0, single buffered']
    #allocation4 [shape = 's32[1]{0}', space=sflag, size = 0x4, scoped, tag = 'scoped memory for tpu_custom_call.1']
    %12 = vsyncpa [#allocation4], 0
    // Predicated region
    $region2: #{tpu_custom_call.1} parent=1 // pred_check
      _
    $region3: #{tpu_custom_call.1} parent=1 // pred_check_branch
      %14 = sbr.rel (0) target = $region5
    $region4: #{tpu_custom_call.1} parent=1 // pred_region
      _
    $region5: #{tpu_custom_call.1} parent=1 // pred_fallthru
      _
    // Predicated region
    $region6: #{tpu_custom_call.1} parent=1 // pred_check
      _
    $region7: #{tpu_custom_call.1} parent=1 // pred_check_branch
      %16 = sbr.rel (0) target = $region9
    $region8: #{tpu_custom_call.1} parent=1 // pred_region
      _
    $region9: #{tpu_custom_call.1} parent=1 // pred_fallthru
      _
    // Predicated region
    $region10: #{tpu_custom_call.1} parent=1 // pred_check
      _
    $region11: #{tpu_custom_call.1} parent=1 // pred_check_branch
      %18 = sbr.rel (0) target = $region13
    $region12: #{tpu_custom_call.1} parent=1 // pred_region
      _
    $region13: #{tpu_custom_call.1} parent=1 // pred_fallthru
      _
    // Predicated region
    $region14: #{tpu_custom_call.1} parent=1 // pred_check
      _
    $region15: #{tpu_custom_call.1} parent=1 // pred_check_branch
      %20 = sbr.rel (0) target = $region17
    $region16: #{tpu_custom_call.1} parent=1 // pred_region
      _
    $region17: #{tpu_custom_call.1} parent=1 // pred_fallthru
      _
    // Predicated region
    $region18: #{tpu_custom_call.1} parent=1 // pred_check
      _
    $region19: #{tpu_custom_call.1} parent=1 // pred_check_branch
      %22 = sbr.rel (0) target = $region21
    $region20: #{tpu_custom_call.1} parent=1 // pred_region
      _
    $region21: #{tpu_custom_call.1} parent=1 // pred_fallthru
      _
    %v23 = vld [vmem:[%s0] sm:$0xff]
    %v24 = vld [vmem:[%s0 + $0x8] sm:$0xff]
    %v25 = vld [vmem:[%s0 + $0x10] sm:$0xff]
    %v26 = vld [vmem:[%s0 + $0x18] sm:$0xff]
    %v27 = vld [vmem:[%s1] sm:$0xff]
    %v28 = vld [vmem:[%s1 + $0x8] sm:$0xff]
    %v29 = vld [vmem:[%s1 + $0x10] sm:$0xff]
    %v30 = vld [vmem:[%s1 + $0x18] sm:$0xff]
    %v31 = vld [vmem:[%s1 + $0x20] sm:$0xff]
    %v32 = vld [vmem:[%s1 + $0x28] sm:$0xff]
    %v33 = vld [vmem:[%s1 + $0x30] sm:$0xff]
    %v34 = vld [vmem:[%s1 + $0x38] sm:$0xff]
    %v35 = vld [vmem:[%s1 + $0x40] sm:$0xff]
    %v36 = vld [vmem:[%s1 + $0x48] sm:$0xff]
    %v37 = vld [vmem:[%s1 + $0x50] sm:$0xff]
    %v38 = vld [vmem:[%s1 + $0x58] sm:$0xff]
    %v39 = vld [vmem:[%s1 + $0x60] sm:$0xff]
    %v40 = vld [vmem:[%s1 + $0x68] sm:$0xff]
    %v41 = vld [vmem:[%s1 + $0x70] sm:$0xff]
    %v42 = vld [vmem:[%s1 + $0x78] sm:$0xff]
    %v43 = vld [vmem:[%s1 + $0x80] sm:$0xff]
    %v44 = vld [vmem:[%s1 + $0x88] sm:$0xff]
    %v45 = vld [vmem:[%s1 + $0x90] sm:$0xff]
    %v46 = vld [vmem:[%s1 + $0x98] sm:$0xff]
    %v47 = vld [vmem:[%s1 + $0xa0] sm:$0xff]
    %v48 = vld [vmem:[%s1 + $0xa8] sm:$0xff]
    %v49 = vld [vmem:[%s1 + $0xb0] sm:$0xff]
    %v50 = vld [vmem:[%s1 + $0xb8] sm:$0xff]
    %v51 = vld [vmem:[%s1 + $0xc0] sm:$0xff]
    %v52 = vld [vmem:[%s1 + $0xc8] sm:$0xff]
    %v53 = vld [vmem:[%s1 + $0xd0] sm:$0xff]
    %v54 = vld [vmem:[%s1 + $0xd8] sm:$0xff]
    %v55 = vld [vmem:[%s1 + $0xe0] sm:$0xff]
    %v56 = vld [vmem:[%s1 + $0xe8] sm:$0xff]
    %v57 = vld [vmem:[%s1 + $0xf0] sm:$0xff]
    %v58 = vld [vmem:[%s1 + $0xf8] sm:$0xff]
    %v59 = vld [vmem:[%s1 + $0x100] sm:$0xff]
    %v60 = vld [vmem:[%s1 + $0x108] sm:$0xff]
    %v61 = vld [vmem:[%s1 + $0x110] sm:$0xff]
    %v62 = vld [vmem:[%s1 + $0x118] sm:$0xff]
    %v63 = vld [vmem:[%s1 + $0x120] sm:$0xff]
    %v64 = vld [vmem:[%s1 + $0x128] sm:$0xff]
    %v65 = vld [vmem:[%s1 + $0x130] sm:$0xff]
    %v66 = vld [vmem:[%s1 + $0x138] sm:$0xff]
    %v67 = vld [vmem:[%s1 + $0x140] sm:$0xff]
    %v68 = vld [vmem:[%s1 + $0x148] sm:$0xff]
    %v69 = vld [vmem:[%s1 + $0x150] sm:$0xff]
    %v70 = vld [vmem:[%s1 + $0x158] sm:$0xff]
    %v71 = vld [vmem:[%s1 + $0x160] sm:$0xff]
    %v72 = vld [vmem:[%s1 + $0x168] sm:$0xff]
    %v73 = vld [vmem:[%s1 + $0x170] sm:$0xff]
    %v74 = vld [vmem:[%s1 + $0x178] sm:$0xff]
    %v75 = vld [vmem:[%s1 + $0x180] sm:$0xff]
    %v76 = vld [vmem:[%s1 + $0x188] sm:$0xff]
    %v77 = vld [vmem:[%s1 + $0x190] sm:$0xff]
    %v78 = vld [vmem:[%s1 + $0x198] sm:$0xff]
    %v79 = vld [vmem:[%s1 + $0x1a0] sm:$0xff]
    %v80 = vld [vmem:[%s1 + $0x1a8] sm:$0xff]
    %v81 = vld [vmem:[%s1 + $0x1b0] sm:$0xff]
    %v82 = vld [vmem:[%s1 + $0x1b8] sm:$0xff]
    %v83 = vld [vmem:[%s1 + $0x1c0] sm:$0xff]
    %v84 = vld [vmem:[%s1 + $0x1c8] sm:$0xff]
    %v85 = vld [vmem:[%s1 + $0x1d0] sm:$0xff]
    %v86 = vld [vmem:[%s1 + $0x1d8] sm:$0xff]
    %v87 = vld [vmem:[%s1 + $0x1e0] sm:$0xff]
    %v88 = vld [vmem:[%s1 + $0x1e8] sm:$0xff]
    %v89 = vld [vmem:[%s1 + $0x1f0] sm:$0xff]
    %v90 = vld [vmem:[%s1 + $0x1f8] sm:$0xff]
    %v91 = vld [vmem:[%s2] sm:$0x1]
    %v93 = vlaneseq
    %v94 = vshrl.u32 %v93, 7
    %v95 = vsub.s32 0, %v94
    %v96 = vrot.slane %v91, %v95
    %v102 = vcombine.low %v23, %v24
    %v103 = vcombine.high %v23, %v24
    %v104 = vcombine.low %v25, %v26
    %v105 = vcombine.high %v25, %v26
    %v107 = vunpack.c.l.s4 1983009808
    %v108 = vunpack.c.0.s8 %v107
    %v109 = vlaneseq
    %v110 = vshrl.u32 %v109, 7
    %v111 = vsub.s32 %v108, %v110
    %v112 = vrot.slane %v102, %v111
    %v114 = vunpack.c.l.s4 1983009808
    %v115 = vunpack.c.0.s8 %v114
    %v116 = vlaneseq
    %v117 = vshrl.u32 %v116, 7
    %v118 = vsub.s32 %v115, %v117
    %v119 = vrot.slane %v103, %v118
    %v121 = vunpack.c.l.s4 1983009808
    %v122 = vunpack.c.0.s8 %v121
    %v123 = vlaneseq
    %v124 = vshrl.u32 %v123, 7
    %v125 = vsub.s32 %v122, %v124
    %v126 = vrot.slane %v104, %v125
    %v128 = vunpack.c.l.s4 1983009808
    %v129 = vunpack.c.0.s8 %v128
    %v130 = vlaneseq
    %v131 = vshrl.u32 %v130, 7
    %v132 = vsub.s32 %v129, %v131
    %v133 = vrot.slane %v105, %v132
    %v134 = vcombine.low %v112, %v126
    %v135 = vcombine.high %v112, %v126
    %v136 = vcombine.low %v119, %v133
    %v137 = vcombine.high %v119, %v133
    %142 = vmatprep.subr.mxu0 0.0
    %143 = vmatpush1.msra.mxu0 %v27
    %144 = vmatprep.subr.mxu0 0.0
    %145 = vmatpush1.msra.mxu0 %v28
    %146 = vmatprep.subr.mxu0 0.0
    %147 = vmatpush1.msra.mxu0 %v29
    %148 = vmatprep.subr.mxu0 0.0
    %149 = vmatpush1.msra.mxu0 %v30
    %150 = vmatprep.subr.mxu0 0.0
    %151 = vmatpush1.msra.mxu0 %v31
    %152 = vmatprep.subr.mxu0 0.0
    %153 = vmatpush1.msra.mxu0 %v32
    %154 = vmatprep.subr.mxu0 0.0
    %155 = vmatpush1.msra.mxu0 %v33
    %156 = vmatprep.subr.mxu0 0.0
    %157 = vmatpush1.msra.mxu0 %v34
    %158 = vmatprep.subr.mxu0 0.0
    %159 = vmatpush1.msra.mxu0 %v35
    %160 = vmatprep.subr.mxu0 0.0
    %161 = vmatpush1.msra.mxu0 %v36
    %162 = vmatprep.subr.mxu0 0.0
    %163 = vmatpush1.msra.mxu0 %v37
    %164 = vmatprep.subr.mxu0 0.0
    %165 = vmatpush1.msra.mxu0 %v38
    %166 = vmatprep.subr.mxu0 0.0
    %167 = vmatpush1.msra.mxu0 %v39
    %168 = vmatprep.subr.mxu0 0.0
    %169 = vmatpush1.msra.mxu0 %v40
    %170 = vmatprep.subr.mxu0 0.0
    %171 = vmatpush1.msra.mxu0 %v41
    %172 = vmatprep.subr.mxu0 0.0
    %173 = vmatpush1.msra.mxu0 %v42
    %174 = vmatprep.subr.mxu0 0.0
    %175 = vmatpush1.msra.mxu0 %v43
    %176 = vmatprep.subr.mxu0 0.0
    %177 = vmatpush1.msra.mxu0 %v44
    %178 = vmatprep.subr.mxu0 0.0
    %179 = vmatpush1.msra.mxu0 %v45
    %180 = vmatprep.subr.mxu0 0.0
    %181 = vmatpush1.msra.mxu0 %v46
    %182 = vmatprep.subr.mxu0 0.0
    %183 = vmatpush1.msra.mxu0 %v47
    %184 = vmatprep.subr.mxu0 0.0
    %185 = vmatpush1.msra.mxu0 %v48
    %186 = vmatprep.subr.mxu0 0.0
    %187 = vmatpush1.msra.mxu0 %v49
    %188 = vmatprep.subr.mxu0 0.0
    %189 = vmatpush1.msra.mxu0 %v50
    %190 = vmatprep.subr.mxu0 0.0
    %191 = vmatpush1.msra.mxu0 %v51
    %192 = vmatprep.subr.mxu0 0.0
    %193 = vmatpush1.msra.mxu0 %v52
    %194 = vmatprep.subr.mxu0 0.0
    %195 = vmatpush1.msra.mxu0 %v53
    %196 = vmatprep.subr.mxu0 0.0
    %197 = vmatpush1.msra.mxu0 %v54
    %198 = vmatprep.subr.mxu0 0.0
    %199 = vmatpush1.msra.mxu0 %v55
    %200 = vmatprep.subr.mxu0 0.0
    %201 = vmatpush1.msra.mxu0 %v56
    %202 = vmatprep.subr.mxu0 0.0
    %203 = vmatpush1.msra.mxu0 %v57
    %204 = vmatprep.subr.mxu0 0.0
    %205 = vmatpush1.msra.mxu0 %v58
    %206 = vmatprep.mubr.f32.mxu0 %v135
    %207 = vmatmul.mubr.f32.gmra.mrb[0].mxu0 %v134
    %v208 = vpop.f32.mrb[0].mxu0
    %v209 = vadd.f32 %v96, %v208
    %v210 = vpop.f32.mrb[0].mxu0
    %211 = vdwg.mxu0
    %212 = vmatprep.subr.mxu0 0.0
    %213 = vmatpush1.msra.mxu0 %v59
    %214 = vmatprep.subr.mxu0 0.0
    %215 = vmatpush1.msra.mxu0 %v60
    %216 = vmatprep.subr.mxu0 0.0
    %217 = vmatpush1.msra.mxu0 %v61
    %218 = vmatprep.subr.mxu0 0.0
    %219 = vmatpush1.msra.mxu0 %v62
    %220 = vmatprep.subr.mxu0 0.0
    %221 = vmatpush1.msra.mxu0 %v63
    %222 = vmatprep.subr.mxu0 0.0
    %223 = vmatpush1.msra.mxu0 %v64
    %224 = vmatprep.subr.mxu0 0.0
    %225 = vmatpush1.msra.mxu0 %v65
    %226 = vmatprep.subr.mxu0 0.0
    %227 = vmatpush1.msra.mxu0 %v66
    %228 = vmatprep.subr.mxu0 0.0
    %229 = vmatpush1.msra.mxu0 %v67
    %230 = vmatprep.subr.mxu0 0.0
    %231 = vmatpush1.msra.mxu0 %v68
    %232 = vmatprep.subr.mxu0 0.0
    %233 = vmatpush1.msra.mxu0 %v69
    %234 = vmatprep.subr.mxu0 0.0
    %235 = vmatpush1.msra.mxu0 %v70
    %236 = vmatprep.subr.mxu0 0.0
    %237 = vmatpush1.msra.mxu0 %v71
    %238 = vmatprep.subr.mxu0 0.0
    %239 = vmatpush1.msra.mxu0 %v72
    %240 = vmatprep.subr.mxu0 0.0
    %241 = vmatpush1.msra.mxu0 %v73
    %242 = vmatprep.subr.mxu0 0.0
    %243 = vmatpush1.msra.mxu0 %v74
    %244 = vmatprep.subr.mxu0 0.0
    %245 = vmatpush1.msra.mxu0 %v75
    %246 = vmatprep.subr.mxu0 0.0
    %247 = vmatpush1.msra.mxu0 %v76
    %248 = vmatprep.subr.mxu0 0.0
    %249 = vmatpush1.msra.mxu0 %v77
    %250 = vmatprep.subr.mxu0 0.0
    %251 = vmatpush1.msra.mxu0 %v78
    %252 = vmatprep.subr.mxu0 0.0
    %253 = vmatpush1.msra.mxu0 %v79
    %254 = vmatprep.subr.mxu0 0.0
    %255 = vmatpush1.msra.mxu0 %v80
    %256 = vmatprep.subr.mxu0 0.0
    %257 = vmatpush1.msra.mxu0 %v81
    %258 = vmatprep.subr.mxu0 0.0
    %259 = vmatpush1.msra.mxu0 %v82
    %260 = vmatprep.subr.mxu0 0.0
    %261 = vmatpush1.msra.mxu0 %v83
    %262 = vmatprep.subr.mxu0 0.0
    %263 = vmatpush1.msra.mxu0 %v84
    %264 = vmatprep.subr.mxu0 0.0
    %265 = vmatpush1.msra.mxu0 %v85
    %266 = vmatprep.subr.mxu0 0.0
    %267 = vmatpush1.msra.mxu0 %v86
    %268 = vmatprep.subr.mxu0 0.0
    %269 = vmatpush1.msra.mxu0 %v87
    %270 = vmatprep.subr.mxu0 0.0
    %271 = vmatpush1.msra.mxu0 %v88
    %272 = vmatprep.subr.mxu0 0.0
    %273 = vmatpush1.msra.mxu0 %v89
    %274 = vmatprep.subr.mxu0 0.0
    %275 = vmatpush1.msra.mxu0 %v90
    %276 = vmatprep.mubr.f32.mxu0 %v137
    %277 = vmatmul.mubr.f32.gmra.mrb[0].mxu0 %v136
    %v278 = vpop.f32.mrb[0].mxu0
    %v279 = vadd.f32 %v209, %v278
    %v280 = vpop.f32.mrb[0].mxu0
    %281 = vdwg.mxu0
    %v282 = vmax.f32 %v279, 0.0
    %v283 = vld [vmem:[%s3] sm:$0x1]
    %v285 = vlaneseq
    %v286 = vshrl.u32 %v285, 7
    %v287 = vsub.s32 0, %v286
    %v288 = vrot.slane %v283, %v287
    %v290 = vmul.f32 %v282, %v288
    %vm291 = vcmask 408576
    %v292 = vsel %vm291, %v290, 0.0
    %293 = vadd.xlane.f32.xlu0 %v292
    %v294 = vpop.xlane.xlu0 %293
    %295 = vxpose.xlu0.b32.start [1/16] %v294, 128
    %296 = vxpose.xlu0.b32.cont [2/16] 0.0, 128
    %297 = vxpose.xlu0.b32.cont [3/16] 0.0, 128
    %298 = vxpose.xlu0.b32.cont [4/16] 0.0, 128
    %299 = vxpose.xlu0.b32.cont [5/16] 0.0, 128
    %300 = vxpose.xlu0.b32.cont [6/16] 0.0, 128
    %301 = vxpose.xlu0.b32.cont [7/16] 0.0, 128
    %302 = vxpose.xlu0.b32.cont [8/16] 0.0, 128
    %303 = vxpose.xlu0.b32.cont [9/16] 0.0, 128
    %304 = vxpose.xlu0.b32.cont [10/16] 0.0, 128
    %305 = vxpose.xlu0.b32.cont [11/16] 0.0, 128
    %306 = vxpose.xlu0.b32.cont [12/16] 0.0, 128
    %307 = vxpose.xlu0.b32.cont [13/16] 0.0, 128
    %308 = vxpose.xlu0.b32.cont [14/16] 0.0, 128
    %309 = vxpose.xlu0.b32.cont [15/16] 0.0, 128
    %310 = vxpose.xlu0.b32.end [16/16] 0.0, 128
    %v311 = vpop.trf.xlu0
    %v312 = vpop.trf.xlu0
    %v313 = vpop.trf.xlu0
    %v314 = vpop.trf.xlu0
    %v315 = vpop.trf.xlu0
    %v316 = vpop.trf.xlu0
    %v317 = vpop.trf.xlu0
    %v318 = vpop.trf.xlu0
    %v319 = vpop.trf.xlu0
    %v320 = vpop.trf.xlu0
    %v321 = vpop.trf.xlu0
    %v322 = vpop.trf.xlu0
    %v323 = vpop.trf.xlu0
    %v324 = vpop.trf.xlu0
    %v325 = vpop.trf.xlu0
    %v326 = vpop.trf.xlu0
    %v327 = vld [vmem:[#allocation2] sm:$0x1]
    %329 = vset.pattern.permute.xlu0 0
    %330 = vperm.xlu0 %329, %v327
    %v331 = vpop.permute.xlu0 %330
    %v333 = vlaneseq
    %v334 = vshrl.u32 %v333, 7
    %v335 = vsub.s32 0, %v334
    %v336 = vrot.slane %v331, %v335
    %v337 = vadd.f32 %v311, %v336
    %v338 = vxor.u32 %v337, 2147483648
    %v339 = vmul.f32 %v338, 1.442695
    %v340 = vpow.pop %v339
    %v341 = vadd.f32 %v340, 1.0
    %v342 = vrcp.pop %v341
    %v343 = vmul.f32 1.0, %v342
    %vm344 = vcmask 57344
    %345 = vst.msk [vmem:[#allocation3] sm:$0x1] %vm344, %v343
    // Predicated region
    $region22: #{tpu_custom_call.1} parent=1 // pred_check
      _
    $region23: #{tpu_custom_call.1} parent=1 // pred_check_branch
      %347 = sbr.rel (0) target = $region25
    $region24: #{tpu_custom_call.1} parent=1 // pred_region
      %s349 = ssub.s32 16, 16
      %350 = vsyncadd [#allocation4], %s349
      %s352 = sshll.u32 [#allocation3], 4
      %s353 = int_to_ptr.vmem [resolvable:$true] %s352
      %355 = dma.vmem_to_hbm [thread:$0]  %s353, 16, %s5, [#allocation4]
    $region25: #{tpu_custom_call.1} parent=1 // pred_fallthru
      _
    // Predicated region
    $region26: #{tpu_custom_call.1} parent=1 // pred_check
      _
    $region27: #{tpu_custom_call.1} parent=1 // pred_check_branch
      %357 = sbr.rel (0) target = $region29
    $region28: #{tpu_custom_call.1} parent=1 // pred_region
      %358 = dma.done [#allocation4], 16
    $region29: #{tpu_custom_call.1} parent=1 // pred_fallthru
      _
    %359 = vsyncpa [#allocation4], 1

</llo_original>
